<compile_context>
chip_gen: v6e
topology: v6e:2x2x1
jax: 0.10.0
libtpu: 0.0.40
codegen_flags: <defaults>
</compile_context>

<pallas_src>
import jax
import jax.numpy as jnp
from jax import lax
from jax.experimental import pallas as pl
from jax.experimental.pallas import tpu as pltpu


def _round_up(x: int, m: int) -> int:
    return ((x + m - 1) // m) * m


def _vmem_budget_bytes() -> int:
    # ~75% of physical VMEM: 96 MiB on v5e/v6e (128 MiB phys), 48 MiB on v7x (64 MiB).
    try:
        cap = int(pltpu.get_tpu_info().vmem_capacity_bytes)
    except Exception:
        cap = 64 * 1024 * 1024
    return min(cap * 3 // 4, 96 * 1024 * 1024)


# ---------------------------------------------------------------------------
# Fused single-dispatch kernel (typical PairScore sizes)
# ---------------------------------------------------------------------------
def _pair_score_fused_kernel(l_ref, v_ref, wv_ref, wg_ref, bw_ref, g_ref, w2_ref,
                             fcb_ref, o_ref):
    # l_ref:  (1, nb)        logits
    # v_ref:  (nb, vis_dim)  visual features
    # wv_ref: (vis_dim, wsp) = W.weight[:, :vis_dim].T   (word dim zero-padded to wsp)
    # wg_ref: (vis_dim, wsp) = W.weight[:, vis_dim:].T
    # bw_ref: (1, wsp)       = W.bias        (f32, zero-padded)
    # g_ref:  (1, wsp)       = w_emb * fc.w  (f32, zero-padded)
    # w2_ref: (1, wsp)       = w_emb ** 2    (f32, zero-padded)
    # fcb_ref:(1, 1)         = fc.bias       (f32)
    # o_ref:  (1, nb)        scores (lane-dense)
    logits = l_ref[...].astype(jnp.float32)
    m = jnp.max(logits, axis=-1, keepdims=True)
    e = jnp.exp(logits - m)
    s = e / jnp.sum(e, axis=-1, keepdims=True)                     # softmax over bboxes

    # pooled visual context projected through the second half of W (+ bias)
    v2 = jnp.dot(s.astype(v_ref.dtype), v_ref[...],
                 preferred_element_type=jnp.float32)               # (1, vis_dim)
    ctx = jnp.dot(v2.astype(wg_ref.dtype), wg_ref[...],
                  preferred_element_type=jnp.float32) + bw_ref[...]  # (1, wsp)

    # per-row projection through the first half of W
    y = jnp.dot(v_ref[...], wv_ref[...],
                preferred_element_type=jnp.float32) + ctx          # (nb, wsp), f32

    # fc(normalize(y*w)) without materializing z or f; lane-dense (1, nb) result.
    dn = (((1,), (1,)), ((), ()))
    t = lax.dot_general(g_ref[...], y, dn, preferred_element_type=jnp.float32)       # (1, nb)
    ss = lax.dot_general(w2_ref[...], y * y, dn, preferred_element_type=jnp.float32)  # (1, nb)
    # F.normalize(p=2, dim=1, eps=1e-12): 1/max(||z||, eps) == rsqrt(max(ss, eps^2))
    o_ref[...] = (t * lax.rsqrt(jnp.maximum(ss, 1e-24)) + fcb_ref[...]).astype(o_ref.dtype)


# ---------------------------------------------------------------------------
# Tiled row kernel (fallback for very large num_bbox)
# ---------------------------------------------------------------------------
def _pair_score_row_kernel(v_ref, wv_ref, ctx_ref, g_ref, w2_ref, fcb_ref, o_ref):
    # v_ref:   (rt, vis_dim)    row tile of v
    # wv_ref:  (vis_dim, wsp)   resident weight
    # ctx_ref/g_ref/w2_ref: (1, wsp) f32 ; fcb_ref: (1, 1) f32 ; o_ref: (1, rt)
    # NOTE: the last grid step can contain garbage rows past num_bbox; those may
    # produce inf/nan locally, which is harmless because rows are independent and
    # Pallas masks stores past the output boundary — do NOT "fix" by reading them.
    y = jnp.dot(v_ref[...], wv_ref[...],
                preferred_element_type=jnp.float32) + ctx_ref[...]  # (rt, wsp) f32
    dn = (((1,), (1,)), ((), ()))
    t = lax.dot_general(g_ref[...], y, dn, preferred_element_type=jnp.float32)       # (1, rt)
    ss = lax.dot_general(w2_ref[...], y * y, dn, preferred_element_type=jnp.float32)  # (1, rt)
    o_ref[...] = (t * lax.rsqrt(jnp.maximum(ss, 1e-24)) + fcb_ref[...]).astype(o_ref.dtype)


# ---------------------------------------------------------------------------
# One-time weight preprocessing (hoisted out of the per-call hot path)
# ---------------------------------------------------------------------------
def prepare_pair_score_params(W_weight, W_bias, fc_weight, fc_bias):
    """Split/transpose the concat-linear W, transpose fc, and zero-pad word_size
    to a multiple of 128 so MXU passes and lane loads/stores are full width.
    Call once and reuse across pair_score calls."""
    word_size, two_vis = W_weight.shape
    vis_dim = two_vis // 2
    assert fc_weight.shape == (1, word_size)
    wsp = _round_up(word_size, 128)
    pad = wsp - word_size
    w_t = W_weight.T                                        # (2*vis_dim, word_size)
    wv_t = jnp.pad(w_t[:vis_dim], ((0, 0), (0, pad)))       # (vis_dim, wsp), keeps weight dtype
    wg_t = jnp.pad(w_t[vis_dim:], ((0, 0), (0, pad)))       # (vis_dim, wsp)
    bw = jnp.pad(W_bias.astype(jnp.float32), (0, pad)).reshape(1, wsp)
    fc_w = jnp.pad(fc_weight.reshape(-1).astype(jnp.float32), (0, pad)).reshape(1, wsp)
    fc_b = fc_bias.astype(jnp.float32).reshape(1, 1)
    return dict(vis_dim=vis_dim, word_size=word_size, wsp=wsp,
                wv_t=wv_t, wg_t=wg_t, bw=bw, fc_w=fc_w, fc_b=fc_b)


# ---------------------------------------------------------------------------
# Wrapper
# ---------------------------------------------------------------------------
def pair_score(v, l, w_emb, params, *, force_tiled: bool = False):
    """Pallas equivalent of PairScore.forward.

    v: (num_bbox, vis_dim), l: (num_bbox,), w_emb: (word_size,)
    params: output of prepare_pair_score_params (cached across calls).
    Returns f32 scores of shape (num_bbox,).
    """
    nb, vis_dim = v.shape
    assert vis_dim == params["vis_dim"]
    ws, wsp = params["word_size"], params["wsp"]
    wv_t, wg_t, bw = params["wv_t"], params["wg_t"], params["bw"]
    fc_w, fc_b = params["fc_w"], params["fc_b"]

    # Per-call word-embedding folds (tiny (1, wsp) f32 vectors).
    w_pad = jnp.pad(w_emb.astype(jnp.float32), (0, wsp - ws)).reshape(1, wsp)
    g = w_pad * fc_w           # w ⊙ fc.weight  ->  fc(z)   = y @ g^T
    w2 = w_pad * w_pad         # w ⊙ w          ->  ||z||^2 = (y*y) @ w2^T

    budget = _vmem_budget_bytes()

    # ---- fused single-dispatch path (typical sizes) --------------------------
    fused_bytes = (
        nb * vis_dim * v.dtype.itemsize                 # v resident in VMEM
        + 2 * vis_dim * wsp * wv_t.dtype.itemsize       # Wv^T, Wg^T
        + 4 * nb * wsp * 4                              # y / y*y temporaries + slack (f32)
        + 16 * wsp * 4 + 16 * nb * 4
    )
    if not force_tiled and fused_bytes <= budget // 2:
        out = pl.pallas_call(
            _pair_score_fused_kernel,
            out_shape=jax.ShapeDtypeStruct((1, nb), jnp.float32),
            compiler_params=pltpu.CompilerParams(vmem_limit_bytes=budget),
        )(l.reshape(1, nb), v, wv_t, wg_t, bw, g, w2, fc_b)
        return out[0]

    # ---- tiled fallback (very large num_bbox) --------------------------------
    # Softmax pooling + ctx projection is one global GEMV -> hoist to plain XLA.
    s = jax.nn.softmax(l.astype(jnp.float32))
    v2 = jnp.dot(s.reshape(1, nb).astype(v.dtype), v, preferred_element_type=jnp.float32)
    ctx = jnp.dot(v2.astype(wg_t.dtype), wg_t, preferred_element_type=jnp.float32) + bw  # (1, wsp) f32

    # Row tile: fit ~75% of the VMEM budget AND keep >= 2 tiles (v7x megacore).
    per_row = 2 * vis_dim * v.dtype.itemsize + 2 * wsp * 4          # dbl-buffered v rows + f32 temps
    resident = 2 * vis_dim * wsp * wv_t.dtype.itemsize + 16 * wsp * 4
    rt_vmem = ((budget * 3 // 4 - resident) // per_row // 128) * 128
    rt_mega = _round_up(pl.cdiv(nb, 2), 128)
    rt = int(max(128, min(1024, rt_vmem, rt_mega)))
    grid = (pl.cdiv(nb, rt),)

    out = pl.pallas_call(
        _pair_score_row_kernel,
        out_shape=jax.ShapeDtypeStruct((1, nb), jnp.float32),
        grid_spec=pltpu.PrefetchScalarGridSpec(
            num_scalar_prefetch=0,
            grid=grid,
            in_specs=[
                pl.BlockSpec((rt, vis_dim), lambda i: (i, 0)),    # v row tile
                pl.BlockSpec((vis_dim, wsp), lambda i: (0, 0)),   # Wv^T (resident)
                pl.BlockSpec((1, wsp), lambda i: (0, 0)),         # ctx
                pl.BlockSpec((1, wsp), lambda i: (0, 0)),         # w ⊙ fc_w
                pl.BlockSpec((1, wsp), lambda i: (0, 0)),         # w^2
                pl.BlockSpec((1, 1), lambda i: (0, 0)),           # fc bias
            ],
            out_specs=pl.BlockSpec((1, rt), lambda i: (0, i)),    # lane-dense scores
        ),
        compiler_params=pltpu.CompilerParams(
            dimension_semantics=("parallel",),                    # shards row tiles across TCs (v7x)
            vmem_limit_bytes=budget,
        ),
    )(v, wv_t, ctx, g, w2, fc_b)
    return out[0]


# ---------------------------------------------------------------------------
# Plain-JAX reference mirroring the PyTorch forward exactly.
# ---------------------------------------------------------------------------
def _reference(v, l, w, W_weight, W_bias, fc_weight, fc_bias):
    s = jax.nn.softmax(l)
    v2 = s[None, :] @ v
    v3 = jnp.concatenate([v, jnp.broadcast_to(v2, v.shape)], axis=1)
    y = v3 @ W_weight.T + W_bias
    z = y * w[None, :]
    norm = jnp.maximum(jnp.linalg.norm(z, axis=1, keepdims=True), 1e-12)
    f = z / norm
    return (f @ fc_weight.T + fc_bias)[:, 0]


if __name__ == "__main__":
    NUM_BBOX, VIS_DIM, WORD_SIZE = 16, 64, 32

    key = jax.random.PRNGKey(0)
    ks = jax.random.split(key, 9)
    v = jax.random.normal(ks[0], (NUM_BBOX, VIS_DIM), dtype=jnp.float32)
    l = jax.random.normal(ks[1], (NUM_BBOX,), dtype=jnp.float32)
    w = jax.random.normal(ks[2], (WORD_SIZE,), dtype=jnp.float32)
    W_weight = jax.random.normal(ks[3], (WORD_SIZE, 2 * VIS_DIM), dtype=jnp.float32) * 0.1
    W_bias = jax.random.normal(ks[4], (WORD_SIZE,), dtype=jnp.float32) * 0.1
    fc_weight = jax.random.normal(ks[5], (1, WORD_SIZE), dtype=jnp.float32) * 0.1
    fc_bias = jax.random.normal(ks[6], (1,), dtype=jnp.float32) * 0.1

    # One-time weight prep (cached across calls).
    params = prepare_pair_score_params(W_weight, W_bias, fc_weight, fc_bias)

    # Fused single-kernel path (typical PairScore size).
    out = jax.block_until_ready(pair_score(v, l, w, params))
    ref = _reference(v, l, w, W_weight, W_bias, fc_weight, fc_bias)
    assert out.shape == (NUM_BBOX,)
    assert jnp.allclose(out, ref, atol=1e-3, rtol=1e-3), "fused path mismatch vs reference"

    # Tiled fallback path (large num_bbox): exercises ragged boundary masking,
    # lane-dense output and megacore-sized grid.
    NB2 = 300
    v_big = jax.random.normal(ks[7], (NB2, VIS_DIM), dtype=jnp.float32)
    l_big = jax.random.normal(ks[8], (NB2,), dtype=jnp.float32)
    out2 = jax.block_until_ready(pair_score(v_big, l_big, w, params, force_tiled=True))
    ref2 = _reference(v_big, l_big, w, W_weight, W_bias, fc_weight, fc_bias)
    assert out2.shape == (NB2,)
    assert jnp.allclose(out2, ref2, atol=1e-3, rtol=1e-3), "tiled path mismatch vs reference"

    print("KERNEL_OK")
</pallas_src>

<mosaic_0001>
module attributes {stable_mosaic.version = 11 : i64} {
  func.func @_pair_score_fused_kernel(%arg0: memref<1x16xf32, #tpu.memory_space<vmem>>, %arg1: memref<16x64xf32, #tpu.memory_space<vmem>>, %arg2: memref<64x128xf32, #tpu.memory_space<vmem>>, %arg3: memref<64x128xf32, #tpu.memory_space<vmem>>, %arg4: memref<1x128xf32, #tpu.memory_space<vmem>>, %arg5: memref<1x128xf32, #tpu.memory_space<vmem>>, %arg6: memref<1x128xf32, #tpu.memory_space<vmem>>, %arg7: memref<1x1xf32, #tpu.memory_space<vmem>>, %arg8: memref<1x16xf32, #tpu.memory_space<vmem>>) attributes {dimension_semantics = [], scalar_prefetch = 0 : i64, scratch_operands = 0 : i64, tpu.core_type = #tpu.core_type<tc>} {
    %c0 = arith.constant 0 : index
    %c0_0 = arith.constant 0 : index
    %0 = vector.load %arg0[%c0, %c0_0] : memref<1x16xf32, #tpu.memory_space<vmem>>, vector<1x16xf32>
    %cst = arith.constant dense<0xFF800000> : vector<1xf32>
    %1 = vector.multi_reduction <maximumf>, %0, %cst [1] : vector<1x16xf32> to vector<1xf32>
    %2 = vector.shape_cast %1 : vector<1xf32> to vector<1x1xf32>
    %3 = vector.broadcast %2 : vector<1x1xf32> to vector<1x16xf32>
    %4 = arith.subf %0, %3 : vector<1x16xf32>
    %5 = math.exp %4 : vector<1x16xf32>
    %cst_1 = arith.constant dense<0.000000e+00> : vector<1xf32>
    %6 = vector.multi_reduction <add>, %5, %cst_1 [1] : vector<1x16xf32> to vector<1xf32>
    %7 = vector.shape_cast %6 : vector<1xf32> to vector<1x1xf32>
    %8 = vector.broadcast %7 : vector<1x1xf32> to vector<1x16xf32>
    %9 = arith.divf %5, %8 : vector<1x16xf32>
    %c0_2 = arith.constant 0 : index
    %c0_3 = arith.constant 0 : index
    %10 = vector.load %arg1[%c0_2, %c0_3] : memref<16x64xf32, #tpu.memory_space<vmem>>, vector<16x64xf32>
    %cst_4 = arith.constant dense<0.000000e+00> : vector<1x64xf32>
    %11 = tpu.matmul %9, %10, %cst_4 {dimension_numbers = #tpu.dot_dimension_numbers<[1], [0], [0], [1], [0, 0, 1, 1], [], []>} : vector<1x16xf32>, vector<16x64xf32>, vector<1x64xf32> -> vector<1x64xf32>
    %c0_5 = arith.constant 0 : index
    %c0_6 = arith.constant 0 : index
    %12 = vector.load %arg3[%c0_5, %c0_6] : memref<64x128xf32, #tpu.memory_space<vmem>>, vector<64x128xf32>
    %cst_7 = arith.constant dense<0.000000e+00> : vector<1x128xf32>
    %13 = tpu.matmul %11, %12, %cst_7 {dimension_numbers = #tpu.dot_dimension_numbers<[1], [0], [0], [1], [0, 0, 1, 1], [], []>} : vector<1x64xf32>, vector<64x128xf32>, vector<1x128xf32> -> vector<1x128xf32>
    %c0_8 = arith.constant 0 : index
    %c0_9 = arith.constant 0 : index
    %14 = vector.load %arg4[%c0_8, %c0_9] : memref<1x128xf32, #tpu.memory_space<vmem>>, vector<1x128xf32>
    %15 = arith.addf %13, %14 : vector<1x128xf32>
    %c0_10 = arith.constant 0 : index
    %c0_11 = arith.constant 0 : index
    %16 = vector.load %arg1[%c0_10, %c0_11] : memref<16x64xf32, #tpu.memory_space<vmem>>, vector<16x64xf32>
    %c0_12 = arith.constant 0 : index
    %c0_13 = arith.constant 0 : index
    %17 = vector.load %arg2[%c0_12, %c0_13] : memref<64x128xf32, #tpu.memory_space<vmem>>, vector<64x128xf32>
    %cst_14 = arith.constant dense<0.000000e+00> : vector<16x128xf32>
    %18 = tpu.matmul %16, %17, %cst_14 {dimension_numbers = #tpu.dot_dimension_numbers<[1], [0], [0], [1], [0, 0, 1, 1], [], []>} : vector<16x64xf32>, vector<64x128xf32>, vector<16x128xf32> -> vector<16x128xf32>
    %19 = vector.broadcast %15 : vector<1x128xf32> to vector<16x128xf32>
    %20 = arith.addf %18, %19 : vector<16x128xf32>
    %c0_15 = arith.constant 0 : index
    %c0_16 = arith.constant 0 : index
    %21 = vector.load %arg5[%c0_15, %c0_16] : memref<1x128xf32, #tpu.memory_space<vmem>>, vector<1x128xf32>
    %cst_17 = arith.constant dense<0.000000e+00> : vector<1x16xf32>
    %22 = tpu.matmul %21, %20, %cst_17 {dimension_numbers = #tpu.dot_dimension_numbers<[1], [1], [0], [0], [0, 0, 1, 0], [], []>} : vector<1x128xf32>, vector<16x128xf32>, vector<1x16xf32> -> vector<1x16xf32>
    %c0_18 = arith.constant 0 : index
    %c0_19 = arith.constant 0 : index
    %23 = vector.load %arg6[%c0_18, %c0_19] : memref<1x128xf32, #tpu.memory_space<vmem>>, vector<1x128xf32>
    %24 = arith.mulf %20, %20 : vector<16x128xf32>
    %cst_20 = arith.constant dense<0.000000e+00> : vector<1x16xf32>
    %25 = tpu.matmul %23, %24, %cst_20 {dimension_numbers = #tpu.dot_dimension_numbers<[1], [1], [0], [0], [0, 0, 1, 0], [], []>} : vector<1x128xf32>, vector<16x128xf32>, vector<1x16xf32> -> vector<1x16xf32>
    %cst_21 = arith.constant 1.000000e-24 : f32
    %26 = vector.broadcast %cst_21 : f32 to vector<1x16xf32>
    %27 = arith.maximumf %25, %26 : vector<1x16xf32>
    %28 = math.rsqrt %27 : vector<1x16xf32>
    %29 = arith.mulf %22, %28 : vector<1x16xf32>
    %c0_22 = arith.constant 0 : index
    %c0_23 = arith.constant 0 : index
    %30 = vector.load %arg7[%c0_22, %c0_23] : memref<1x1xf32, #tpu.memory_space<vmem>>, vector<1x1xf32>
    %31 = vector.broadcast %30 : vector<1x1xf32> to vector<1x16xf32>
    %32 = arith.addf %29, %31 : vector<1x16xf32>
    %c0_24 = arith.constant 0 : index
    %c0_25 = arith.constant 0 : index
    %33 = vector.load %arg8[%c0_24, %c0_25] : memref<1x16xf32, #tpu.memory_space<vmem>>, vector<1x16xf32>
    tpu.vector_store %arg8[%c0_24, %c0_25], %32 {strides = array<i32>} : memref<1x16xf32, #tpu.memory_space<vmem>>, vector<1x16xf32>,
    return
  }
}

</mosaic_0001>

<llo_original>
// kernel: tpu_custom_call.1
$region0: #{tpu_custom_call.1}
  #allocation0 [shape = 'u32[]', space=smem, size = 0x4, offset = 0x4, fixed_abs, tag = 'smem constant byte address 0x4 - core index']
  #allocation1 [shape = 'u32[144,128]{1,0:T(1,128)}', space=vmem, size = 0x12000, scoped, tag = 'internal scratch']
  #allocation2 [shape = 'f32[1,1]{1,0:T(1,128)S(1)}', space=vmem, size = 0x200, scoped, tag = 'scoped memory for tpu_custom_call.1']
  %s0 = inlined_call_operand.vmem [shape: f32[1,16], index: 0, kind: input, shape index: {}]
  %s1 = inlined_call_operand.hbm [shape: f32[16,64], index: 1, kind: input, shape index: {}]
  %s2 = inlined_call_operand.hbm [shape: f32[64,128], index: 2, kind: input, shape index: {}]
  %s3 = inlined_call_operand.hbm [shape: f32[64,128], index: 3, kind: input, shape index: {}]
  %s4 = inlined_call_operand.vmem [shape: f32[1,128], index: 4, kind: input, shape index: {}]
  %s5 = inlined_call_operand.vmem [shape: f32[1,128], index: 5, kind: input, shape index: {}]
  %s6 = inlined_call_operand.vmem [shape: f32[1,128], index: 6, kind: input, shape index: {}]
  %s7 = inlined_call_operand.<no memory space> [shape: f32[1,1], index: 7, kind: input, shape index: {}]
  %s8 = inlined_call_operand.hbm [shape: f32[1,16], index: 8, kind: output, shape index: {}]
  %s9 = sld [smem:[#allocation0]]
  $region54: #{tpu_custom_call.1} parent=0
    _
  %s11 = ssub.s32 1, %s9
  %s12 = scalar_select 0, %s11, %s9
  %v13 = vstv %s7
  %14 = vst [vmem:[#allocation2] sm:$0x1] %v13
  $region1: #{tpu_custom_call.1} parent=0
    #allocation3 [shape = 'u8[8192]{0}', space=vmem, size = 0x2000, scoped, tag = 'input window, operand 1, single buffered']
    #allocation4 [shape = 's32[1]{0}', space=sflag, size = 0x4, scoped, tag = 'scoped memory for tpu_custom_call.1']
    #allocation5 [shape = 's32[1]{0}', space=sflag, size = 0x4, scoped, tag = 'scoped memory for tpu_custom_call.1']
    #allocation6 [shape = 'u8[32768]{0}', space=vmem, size = 0x8000, scoped, tag = 'input window, operand 2, single buffered']
    #allocation7 [shape = 's32[1]{0}', space=sflag, size = 0x4, scoped, tag = 'scoped memory for tpu_custom_call.1']
    #allocation8 [shape = 'u8[32768]{0}', space=vmem, size = 0x8000, scoped, tag = 'input window, operand 3, single buffered']
    #allocation9 [shape = 'u8[512]{0}', space=vmem, size = 0x400, scoped, tag = 'output window, operand 0, single buffered']
    %15 = vsyncpa [#allocation4], 0
    %16 = vsyncpa [#allocation7], 0
    %17 = vsyncpa [#allocation5], 0
    // Predicated region
    $region2: #{tpu_custom_call.1} parent=1 // pred_check
      _
    $region3: #{tpu_custom_call.1} parent=1 // pred_check_branch
      %19 = sbr.rel (0) target = $region5
    $region4: #{tpu_custom_call.1} parent=1 // pred_region
      _
    $region5: #{tpu_custom_call.1} parent=1 // pred_fallthru
      _
    // Predicated region
    $region6: #{tpu_custom_call.1} parent=1 // pred_check
      _
    $region7: #{tpu_custom_call.1} parent=1 // pred_check_branch
      %21 = sbr.rel (0) target = $region9
    $region8: #{tpu_custom_call.1} parent=1 // pred_region
      %s23 = ssub.s32 256, 256
      %24 = vsyncadd [#allocation4], %s23
      %s25 = sshll.u32 [#allocation3], 4
      %s26 = int_to_ptr.vmem [resolvable:$true] %s25
      %31 = dma.hbm_to_vmem [thread:$0]  %s1, 256, %s26, [#allocation4], 128, 128, 8
    $region9: #{tpu_custom_call.1} parent=1 // pred_fallthru
      _
    // Predicated region
    $region10: #{tpu_custom_call.1} parent=1 // pred_check
      _
    $region11: #{tpu_custom_call.1} parent=1 // pred_check_branch
      %33 = sbr.rel (0) target = $region13
    $region12: #{tpu_custom_call.1} parent=1 // pred_region
      %s35 = ssub.s32 1024, 1024
      %36 = vsyncadd [#allocation7], %s35
      %s37 = sshll.u32 [#allocation6], 4
      %s38 = int_to_ptr.vmem [resolvable:$true] %s37
      %43 = dma.hbm_to_vmem [thread:$0]  %s2, 1024, %s38, [#allocation7], 128, 128, 8
    $region13: #{tpu_custom_call.1} parent=1 // pred_fallthru
      _
    // Predicated region
    $region14: #{tpu_custom_call.1} parent=1 // pred_check
      _
    $region15: #{tpu_custom_call.1} parent=1 // pred_check_branch
      %45 = sbr.rel (0) target = $region17
    $region16: #{tpu_custom_call.1} parent=1 // pred_region
      %s47 = ssub.s32 1024, 1024
      %48 = vsyncadd [#allocation7], %s47
      %s49 = sshll.u32 [#allocation8], 4
      %s50 = int_to_ptr.vmem [resolvable:$true] %s49
      %55 = dma.hbm_to_vmem [thread:$0]  %s3, 1024, %s50, [#allocation7], 128, 128, 8
    $region17: #{tpu_custom_call.1} parent=1 // pred_fallthru
      _
    // Predicated region
    $region18: #{tpu_custom_call.1} parent=1 // pred_check
      _
    $region19: #{tpu_custom_call.1} parent=1 // pred_check_branch
      %57 = sbr.rel (0) target = $region21
    $region20: #{tpu_custom_call.1} parent=1 // pred_region
      _
    $region21: #{tpu_custom_call.1} parent=1 // pred_fallthru
      _
    // Predicated region
    $region22: #{tpu_custom_call.1} parent=1 // pred_check
      _
    $region23: #{tpu_custom_call.1} parent=1 // pred_check_branch
      %59 = sbr.rel (0) target = $region25
    $region24: #{tpu_custom_call.1} parent=1 // pred_region
      _
    $region25: #{tpu_custom_call.1} parent=1 // pred_fallthru
      _
    // Predicated region
    $region26: #{tpu_custom_call.1} parent=1 // pred_check
      _
    $region27: #{tpu_custom_call.1} parent=1 // pred_check_branch
      %61 = sbr.rel (0) target = $region29
    $region28: #{tpu_custom_call.1} parent=1 // pred_region
      _
    $region29: #{tpu_custom_call.1} parent=1 // pred_fallthru
      _
    // Predicated region
    $region30: #{tpu_custom_call.1} parent=1 // pred_check
      _
    $region31: #{tpu_custom_call.1} parent=1 // pred_check_branch
      %63 = sbr.rel (0) target = $region33
    $region32: #{tpu_custom_call.1} parent=1 // pred_region
      _
    $region33: #{tpu_custom_call.1} parent=1 // pred_fallthru
      _
    // Predicated region
    $region34: #{tpu_custom_call.1} parent=1 // pred_check
      _
    $region35: #{tpu_custom_call.1} parent=1 // pred_check_branch
      %65 = sbr.rel (0) target = $region37
    $region36: #{tpu_custom_call.1} parent=1 // pred_region
      %66 = dma.done [#allocation4], 256
    $region37: #{tpu_custom_call.1} parent=1 // pred_fallthru
      _
    // Predicated region
    $region38: #{tpu_custom_call.1} parent=1 // pred_check
      _
    $region39: #{tpu_custom_call.1} parent=1 // pred_check_branch
      %68 = sbr.rel (0) target = $region41
    $region40: #{tpu_custom_call.1} parent=1 // pred_region
      %69 = dma.done [#allocation7], 1024
    $region41: #{tpu_custom_call.1} parent=1 // pred_fallthru
      _
    // Predicated region
    $region42: #{tpu_custom_call.1} parent=1 // pred_check
      _
    $region43: #{tpu_custom_call.1} parent=1 // pred_check_branch
      %71 = sbr.rel (0) target = $region45
    $region44: #{tpu_custom_call.1} parent=1 // pred_region
      %72 = dma.done [#allocation7], 1024
    $region45: #{tpu_custom_call.1} parent=1 // pred_fallthru
      _
    %v73 = vld [vmem:[%s0] sm:$0x1]
    %vm74 = vcmask 122880
    %v75 = vsel %vm74, %v73, -inf
    %76 = vmax.xlane.f32.xlu0 %v75
    %v77 = vpop.xlane.xlu0 %76
    %v78 = vsub.f32 %v73, %v77
    %v79 = vmul.f32 %v78, 1.442695
    %v80 = vpow.pop %v79
    %v81 = vsel %vm74, %v80, 0.0
    %82 = vadd.xlane.f32.xlu0 %v81
    %v83 = vpop.xlane.xlu0 %82
    %v84 = vrcp.pop %v83
    %v85 = vmul.f32 %v80, %v84
    %v86 = vld [vmem:[#allocation3] sm:$0xff]
    %v87 = vld [vmem:[#allocation3 + $0x8] sm:$0xff]
    %vm88 = vcmask 130048
    %v90 = vsel %vm88, %v85, 0
    %92 = vmatprep.subr.mxu0 0.0
    %93 = vmatpush1.msra.mxu0 0.0
    %94 = vmatprep.subr.mxu0 0.0
    %95 = vmatpush1.msra.mxu0 0.0
    %96 = vmatprep.subr.mxu0 0.0
    %97 = vmatpush1.msra.mxu0 0.0
    %98 = vmatprep.subr.mxu0 0.0
    %99 = vmatpush1.msra.mxu0 0.0
    %100 = vmatprep.subr.mxu0 0.0
    %101 = vmatpush1.msra.mxu0 0.0
    %102 = vmatprep.subr.mxu0 0.0
    %103 = vmatpush1.msra.mxu0 0.0
    %104 = vmatprep.subr.mxu0 0.0
    %105 = vmatpush1.msra.mxu0 0.0
    %106 = vmatprep.subr.mxu0 0.0
    %107 = vmatpush1.msra.mxu0 0.0
    %108 = vmatprep.subr.mxu0 0.0
    %109 = vmatpush1.msra.mxu0 0.0
    %110 = vmatprep.subr.mxu0 0.0
    %111 = vmatpush1.msra.mxu0 0.0
    %112 = vmatprep.subr.mxu0 0.0
    %113 = vmatpush1.msra.mxu0 0.0
    %114 = vmatprep.subr.mxu0 0.0
    %115 = vmatpush1.msra.mxu0 0.0
    %116 = vmatprep.subr.mxu0 0.0
    %117 = vmatpush1.msra.mxu0 0.0
    %118 = vmatprep.subr.mxu0 0.0
    %119 = vmatpush1.msra.mxu0 0.0
    %120 = vmatprep.subr.mxu0 0.0
    %121 = vmatpush1.msra.mxu0 %v87
    %122 = vmatprep.subr.mxu0 0.0
    %123 = vmatpush1.msra.mxu0 %v86
    %124 = vmatprep.subr.mxu0 0.0
    %125 = vmatpush2.msra.mxu0 0.0
    %126 = vmatprep.subr.mxu0 0.0
    %127 = vmatpush2.msra.mxu0 0.0
    %128 = vmatprep.subr.mxu0 0.0
    %129 = vmatpush2.msra.mxu0 0.0
    %130 = vmatprep.subr.mxu0 0.0
    %131 = vmatpush2.msra.mxu0 0.0
    %132 = vmatprep.subr.mxu0 0.0
    %133 = vmatpush2.msra.mxu0 0.0
    %134 = vmatprep.subr.mxu0 0.0
    %135 = vmatpush2.msra.mxu0 0.0
    %136 = vmatprep.subr.mxu0 0.0
    %137 = vmatpush2.msra.mxu0 0.0
    %138 = vmatprep.subr.mxu0 0.0
    %139 = vmatpush2.msra.mxu0 0.0
    %140 = vmatprep.subr.mxu0 0.0
    %141 = vmatpush2.msra.mxu0 0.0
    %142 = vmatprep.subr.mxu0 0.0
    %143 = vmatpush2.msra.mxu0 0.0
    %144 = vmatprep.subr.mxu0 0.0
    %145 = vmatpush2.msra.mxu0 0.0
    %146 = vmatprep.subr.mxu0 0.0
    %147 = vmatpush2.msra.mxu0 0.0
    %148 = vmatprep.subr.mxu0 0.0
    %149 = vmatpush2.msra.mxu0 0.0
    %150 = vmatprep.subr.mxu0 0.0
    %151 = vmatpush2.msra.mxu0 0.0
    %152 = vmatprep.subr.mxu0 0.0
    %153 = vmatpush2.msra.mxu0 0.0
    %154 = vmatprep.subr.mxu0 0.0
    %155 = vmatpush2.msra.mxu0 0.0
    %156 = vmatprep.mubr.f32.mxu0 0.0
    %157 = vmatmul.mubr.f32.gmra.mxu0 %v90
    %v158 = vpop.f32.mrf.mxu0
    %v159 = vadd.f32 0.0, %v158
    %v160 = vpop.f32.mrf.mxu0
    %161 = vdwg.mxu0
    %v162 = vld [vmem:[#allocation8] sm:$0xff]
    %v163 = vld [vmem:[#allocation8 + $0x8] sm:$0xff]
    %v164 = vld [vmem:[#allocation8 + $0x10] sm:$0xff]
    %v165 = vld [vmem:[#allocation8 + $0x18] sm:$0xff]
    %v166 = vld [vmem:[#allocation8 + $0x20] sm:$0xff]
    %v167 = vld [vmem:[#allocation8 + $0x28] sm:$0xff]
    %v168 = vld [vmem:[#allocation8 + $0x30] sm:$0xff]
    %v169 = vld [vmem:[#allocation8 + $0x38] sm:$0xff]
    %v170 = vld [vmem:[%s4] sm:$0x1]
    %vm171 = vcmask 523264
    %v173 = vsel %vm171, %v159, 0
    %175 = vmatprep.subr.mxu0 0.0
    %176 = vmatpush1.msra.mxu0 0.0
    %177 = vmatprep.subr.mxu0 0.0
    %178 = vmatpush1.msra.mxu0 0.0
    %179 = vmatprep.subr.mxu0 0.0
    %180 = vmatpush1.msra.mxu0 0.0
    %181 = vmatprep.subr.mxu0 0.0
    %182 = vmatpush1.msra.mxu0 0.0
    %183 = vmatprep.subr.mxu0 0.0
    %184 = vmatpush1.msra.mxu0 0.0
    %185 = vmatprep.subr.mxu0 0.0
    %186 = vmatpush1.msra.mxu0 0.0
    %187 = vmatprep.subr.mxu0 0.0
    %188 = vmatpush1.msra.mxu0 0.0
    %189 = vmatprep.subr.mxu0 0.0
    %190 = vmatpush1.msra.mxu0 0.0
    %191 = vmatprep.subr.mxu0 0.0
    %192 = vmatpush1.msra.mxu0 %v169
    %193 = vmatprep.subr.mxu0 0.0
    %194 = vmatpush1.msra.mxu0 %v168
    %195 = vmatprep.subr.mxu0 0.0
    %196 = vmatpush1.msra.mxu0 %v167
    %197 = vmatprep.subr.mxu0 0.0
    %198 = vmatpush1.msra.mxu0 %v166
    %199 = vmatprep.subr.mxu0 0.0
    %200 = vmatpush1.msra.mxu0 %v165
    %201 = vmatprep.subr.mxu0 0.0
    %202 = vmatpush1.msra.mxu0 %v164
    %203 = vmatprep.subr.mxu0 0.0
    %204 = vmatpush1.msra.mxu0 %v163
    %205 = vmatprep.subr.mxu0 0.0
    %206 = vmatpush1.msra.mxu0 %v162
    %207 = vmatprep.subr.mxu0 0.0
    %208 = vmatpush2.msra.mxu0 0.0
    %209 = vmatprep.subr.mxu0 0.0
    %210 = vmatpush2.msra.mxu0 0.0
    %211 = vmatprep.subr.mxu0 0.0
    %212 = vmatpush2.msra.mxu0 0.0
    %213 = vmatprep.subr.mxu0 0.0
    %214 = vmatpush2.msra.mxu0 0.0
    %215 = vmatprep.subr.mxu0 0.0
    %216 = vmatpush2.msra.mxu0 0.0
    %217 = vmatprep.subr.mxu0 0.0
    %218 = vmatpush2.msra.mxu0 0.0
    %219 = vmatprep.subr.mxu0 0.0
    %220 = vmatpush2.msra.mxu0 0.0
    %221 = vmatprep.subr.mxu0 0.0
    %222 = vmatpush2.msra.mxu0 0.0
    %223 = vmatprep.subr.mxu0 0.0
    %224 = vmatpush2.msra.mxu0 0.0
    %225 = vmatprep.subr.mxu0 0.0
    %226 = vmatpush2.msra.mxu0 0.0
    %227 = vmatprep.subr.mxu0 0.0
    %228 = vmatpush2.msra.mxu0 0.0
    %229 = vmatprep.subr.mxu0 0.0
    %230 = vmatpush2.msra.mxu0 0.0
    %231 = vmatprep.subr.mxu0 0.0
    %232 = vmatpush2.msra.mxu0 0.0
    %233 = vmatprep.subr.mxu0 0.0
    %234 = vmatpush2.msra.mxu0 0.0
    %235 = vmatprep.subr.mxu0 0.0
    %236 = vmatpush2.msra.mxu0 0.0
    %237 = vmatprep.subr.mxu0 0.0
    %238 = vmatpush2.msra.mxu0 0.0
    %239 = vmatprep.mubr.f32.mxu0 0.0
    %240 = vmatmul.mubr.f32.gmra.mxu0 %v173
    %v241 = vpop.f32.mrf.mxu0
    %v242 = vadd.f32 %v170, %v241
    %v243 = vpop.f32.mrf.mxu0
    %244 = vdwg.mxu0
    %v245 = vld [vmem:[#allocation6] sm:$0xff]
    %v246 = vld [vmem:[#allocation6 + $0x8] sm:$0xff]
    %v247 = vld [vmem:[#allocation6 + $0x10] sm:$0xff]
    %v248 = vld [vmem:[#allocation6 + $0x18] sm:$0xff]
    %v249 = vld [vmem:[#allocation6 + $0x20] sm:$0xff]
    %v250 = vld [vmem:[#allocation6 + $0x28] sm:$0xff]
    %v251 = vld [vmem:[#allocation6 + $0x30] sm:$0xff]
    %v252 = vld [vmem:[#allocation6 + $0x38] sm:$0xff]
    %v253 = vlaneseq
    %v254 = vshrl.u32 %v253, 7
    %v255 = vsub.s32 0, %v254
    %v256 = vrot.slane %v242, %v255
    %v258 = vsel %vm171, %v86, 0
    %v261 = vsel %vm171, %v87, 0
    %263 = vmatprep.subr.mxu0 0.0
    %264 = vmatpush1.msra.mxu0 0.0
    %265 = vmatprep.subr.mxu0 0.0
    %266 = vmatpush1.msra.mxu0 0.0
    %267 = vmatprep.subr.mxu0 0.0
    %268 = vmatpush1.msra.mxu0 0.0
    %269 = vmatprep.subr.mxu0 0.0
    %270 = vmatpush1.msra.mxu0 0.0
    %271 = vmatprep.subr.mxu0 0.0
    %272 = vmatpush1.msra.mxu0 0.0
    %273 = vmatprep.subr.mxu0 0.0
    %274 = vmatpush1.msra.mxu0 0.0
    %275 = vmatprep.subr.mxu0 0.0
    %276 = vmatpush1.msra.mxu0 0.0
    %277 = vmatprep.subr.mxu0 0.0
    %278 = vmatpush1.msra.mxu0 0.0
    %279 = vmatprep.subr.mxu0 0.0
    %280 = vmatpush1.msra.mxu0 %v252
    %281 = vmatprep.subr.mxu0 0.0
    %282 = vmatpush1.msra.mxu0 %v251
    %283 = vmatprep.subr.mxu0 0.0
    %284 = vmatpush1.msra.mxu0 %v250
    %285 = vmatprep.subr.mxu0 0.0
    %286 = vmatpush1.msra.mxu0 %v249
    %287 = vmatprep.subr.mxu0 0.0
    %288 = vmatpush1.msra.mxu0 %v248
    %289 = vmatprep.subr.mxu0 0.0
    %290 = vmatpush1.msra.mxu0 %v247
    %291 = vmatprep.subr.mxu0 0.0
    %292 = vmatpush1.msra.mxu0 %v246
    %293 = vmatprep.subr.mxu0 0.0
    %294 = vmatpush1.msra.mxu0 %v245
    %295 = vmatprep.subr.mxu0 0.0
    %296 = vmatpush2.msra.mxu0 0.0
    %297 = vmatprep.subr.mxu0 0.0
    %298 = vmatpush2.msra.mxu0 0.0
    %299 = vmatprep.subr.mxu0 0.0
    %300 = vmatpush2.msra.mxu0 0.0
    %301 = vmatprep.subr.mxu0 0.0
    %302 = vmatpush2.msra.mxu0 0.0
    %303 = vmatprep.subr.mxu0 0.0
    %304 = vmatpush2.msra.mxu0 0.0
    %305 = vmatprep.subr.mxu0 0.0
    %306 = vmatpush2.msra.mxu0 0.0
    %307 = vmatprep.subr.mxu0 0.0
    %308 = vmatpush2.msra.mxu0 0.0
    %309 = vmatprep.subr.mxu0 0.0
    %310 = vmatpush2.msra.mxu0 0.0
    %311 = vmatprep.subr.mxu0 0.0
    %312 = vmatpush2.msra.mxu0 0.0
    %313 = vmatprep.subr.mxu0 0.0
    %314 = vmatpush2.msra.mxu0 0.0
    %315 = vmatprep.subr.mxu0 0.0
    %316 = vmatpush2.msra.mxu0 0.0
    %317 = vmatprep.subr.mxu0 0.0
    %318 = vmatpush2.msra.mxu0 0.0
    %319 = vmatprep.subr.mxu0 0.0
    %320 = vmatpush2.msra.mxu0 0.0
    %321 = vmatprep.subr.mxu0 0.0
    %322 = vmatpush2.msra.mxu0 0.0
    %323 = vmatprep.subr.mxu0 0.0
    %324 = vmatpush2.msra.mxu0 0.0
    %325 = vmatprep.subr.mxu0 0.0
    %326 = vmatpush2.msra.mxu0 0.0
    %327 = vmatprep.mubr.f32.mxu0 0.0
    %328 = vmatmul.mubr.f32.gmra.mxu0 %v258
    %v329 = vpop.f32.mrf.mxu0
    %v330 = vadd.f32 %v256, %v329
    %v331 = vpop.f32.mrf.mxu0
    %332 = vmatprep.mubr.f32.mxu0 0.0
    %333 = vmatmul.mubr.f32.gmra.mxu0 %v261
    %v334 = vpop.f32.mrf.mxu0
    %v335 = vadd.f32 %v256, %v334
    %v336 = vpop.f32.mrf.mxu0
    %337 = vdwg.mxu0
    %v338 = vld [vmem:[%s5] sm:$0x1]
    %339 = vmatprep.subr.mxu0 0.0
    %340 = vmatpush1.xpose.msra.mxu0 0.0
    %341 = vmatprep.subr.mxu0 0.0
    %342 = vmatpush1.xpose.msra.mxu0 0.0
    %343 = vmatprep.subr.mxu0 0.0
    %344 = vmatpush1.xpose.msra.mxu0 0.0
    %345 = vmatprep.subr.mxu0 0.0
    %346 = vmatpush1.xpose.msra.mxu0 0.0
    %347 = vmatprep.subr.mxu0 0.0
    %348 = vmatpush1.xpose.msra.mxu0 0.0
    %349 = vmatprep.subr.mxu0 0.0
    %350 = vmatpush1.xpose.msra.mxu0 0.0
    %351 = vmatprep.subr.mxu0 0.0
    %352 = vmatpush1.xpose.msra.mxu0 0.0
    %353 = vmatprep.subr.mxu0 0.0
    %354 = vmatpush1.xpose.msra.mxu0 0.0
    %355 = vmatprep.subr.mxu0 0.0
    %356 = vmatpush1.xpose.msra.mxu0 0.0
    %357 = vmatprep.subr.mxu0 0.0
    %358 = vmatpush1.xpose.msra.mxu0 0.0
    %359 = vmatprep.subr.mxu0 0.0
    %360 = vmatpush1.xpose.msra.mxu0 0.0
    %361 = vmatprep.subr.mxu0 0.0
    %362 = vmatpush1.xpose.msra.mxu0 0.0
    %363 = vmatprep.subr.mxu0 0.0
    %364 = vmatpush1.xpose.msra.mxu0 0.0
    %365 = vmatprep.subr.mxu0 0.0
    %366 = vmatpush1.xpose.msra.mxu0 0.0
    %367 = vmatprep.subr.mxu0 0.0
    %368 = vmatpush1.xpose.msra.mxu0 %v335
    %369 = vmatprep.subr.mxu0 0.0
    %370 = vmatpush1.xpose.msra.mxu0 %v330
    %371 = vmatprep.subr.mxu0 0.0
    %372 = vmatpush2.xpose.msra.mxu0 0.0
    %373 = vmatprep.subr.mxu0 0.0
    %374 = vmatpush2.xpose.msra.mxu0 0.0
    %375 = vmatprep.subr.mxu0 0.0
    %376 = vmatpush2.xpose.msra.mxu0 0.0
    %377 = vmatprep.subr.mxu0 0.0
    %378 = vmatpush2.xpose.msra.mxu0 0.0
    %379 = vmatprep.subr.mxu0 0.0
    %380 = vmatpush2.xpose.msra.mxu0 0.0
    %381 = vmatprep.subr.mxu0 0.0
    %382 = vmatpush2.xpose.msra.mxu0 0.0
    %383 = vmatprep.subr.mxu0 0.0
    %384 = vmatpush2.xpose.msra.mxu0 0.0
    %385 = vmatprep.subr.mxu0 0.0
    %386 = vmatpush2.xpose.msra.mxu0 0.0
    %387 = vmatprep.subr.mxu0 0.0
    %388 = vmatpush2.xpose.msra.mxu0 0.0
    %389 = vmatprep.subr.mxu0 0.0
    %390 = vmatpush2.xpose.msra.mxu0 0.0
    %391 = vmatprep.subr.mxu0 0.0
    %392 = vmatpush2.xpose.msra.mxu0 0.0
    %393 = vmatprep.subr.mxu0 0.0
    %394 = vmatpush2.xpose.msra.mxu0 0.0
    %395 = vmatprep.subr.mxu0 0.0
    %396 = vmatpush2.xpose.msra.mxu0 0.0
    %397 = vmatprep.subr.mxu0 0.0
    %398 = vmatpush2.xpose.msra.mxu0 0.0
    %399 = vmatprep.subr.mxu0 0.0
    %400 = vmatpush2.xpose.msra.mxu0 0.0
    %401 = vmatprep.subr.mxu0 0.0
    %402 = vmatpush2.xpose.msra.mxu0 0.0
    %403 = vmatprep.mubr.f32.mxu0 0.0
    %404 = vmatmul.mubr.f32.gmra.mxu0 %v338
    %v405 = vpop.f32.mrf.mxu0
    %v406 = vadd.f32 0.0, %v405
    %v407 = vpop.f32.mrf.mxu0
    %408 = vdwg.mxu0
    %v409 = vld [vmem:[%s6] sm:$0x1]
    %v410 = vmul.f32 %v330, %v330
    %v411 = vmul.f32 %v335, %v335
    %412 = vmatprep.subr.mxu0 0.0
    %413 = vmatpush1.xpose.msra.mxu0 0.0
    %414 = vmatprep.subr.mxu0 0.0
    %415 = vmatpush1.xpose.msra.mxu0 0.0
    %416 = vmatprep.subr.mxu0 0.0
    %417 = vmatpush1.xpose.msra.mxu0 0.0
    %418 = vmatprep.subr.mxu0 0.0
    %419 = vmatpush1.xpose.msra.mxu0 0.0
    %420 = vmatprep.subr.mxu0 0.0
    %421 = vmatpush1.xpose.msra.mxu0 0.0
    %422 = vmatprep.subr.mxu0 0.0
    %423 = vmatpush1.xpose.msra.mxu0 0.0
    %424 = vmatprep.subr.mxu0 0.0
    %425 = vmatpush1.xpose.msra.mxu0 0.0
    %426 = vmatprep.subr.mxu0 0.0
    %427 = vmatpush1.xpose.msra.mxu0 0.0
    %428 = vmatprep.subr.mxu0 0.0
    %429 = vmatpush1.xpose.msra.mxu0 0.0
    %430 = vmatprep.subr.mxu0 0.0
    %431 = vmatpush1.xpose.msra.mxu0 0.0
    %432 = vmatprep.subr.mxu0 0.0
    %433 = vmatpush1.xpose.msra.mxu0 0.0
    %434 = vmatprep.subr.mxu0 0.0
    %435 = vmatpush1.xpose.msra.mxu0 0.0
    %436 = vmatprep.subr.mxu0 0.0
    %437 = vmatpush1.xpose.msra.mxu0 0.0
    %438 = vmatprep.subr.mxu0 0.0
    %439 = vmatpush1.xpose.msra.mxu0 0.0
    %440 = vmatprep.subr.mxu0 0.0
    %441 = vmatpush1.xpose.msra.mxu0 %v411
    %442 = vmatprep.subr.mxu0 0.0
    %443 = vmatpush1.xpose.msra.mxu0 %v410
    %444 = vmatprep.subr.mxu0 0.0
    %445 = vmatpush2.xpose.msra.mxu0 0.0
    %446 = vmatprep.subr.mxu0 0.0
    %447 = vmatpush2.xpose.msra.mxu0 0.0
    %448 = vmatprep.subr.mxu0 0.0
    %449 = vmatpush2.xpose.msra.mxu0 0.0
    %450 = vmatprep.subr.mxu0 0.0
    %451 = vmatpush2.xpose.msra.mxu0 0.0
    %452 = vmatprep.subr.mxu0 0.0
    %453 = vmatpush2.xpose.msra.mxu0 0.0
    %454 = vmatprep.subr.mxu0 0.0
    %455 = vmatpush2.xpose.msra.mxu0 0.0
    %456 = vmatprep.subr.mxu0 0.0
    %457 = vmatpush2.xpose.msra.mxu0 0.0
    %458 = vmatprep.subr.mxu0 0.0
    %459 = vmatpush2.xpose.msra.mxu0 0.0
    %460 = vmatprep.subr.mxu0 0.0
    %461 = vmatpush2.xpose.msra.mxu0 0.0
    %462 = vmatprep.subr.mxu0 0.0
    %463 = vmatpush2.xpose.msra.mxu0 0.0
    %464 = vmatprep.subr.mxu0 0.0
    %465 = vmatpush2.xpose.msra.mxu0 0.0
    %466 = vmatprep.subr.mxu0 0.0
    %467 = vmatpush2.xpose.msra.mxu0 0.0
    %468 = vmatprep.subr.mxu0 0.0
    %469 = vmatpush2.xpose.msra.mxu0 0.0
    %470 = vmatprep.subr.mxu0 0.0
    %471 = vmatpush2.xpose.msra.mxu0 0.0
    %472 = vmatprep.subr.mxu0 0.0
    %473 = vmatpush2.xpose.msra.mxu0 0.0
    %474 = vmatprep.subr.mxu0 0.0
    %475 = vmatpush2.xpose.msra.mxu0 0.0
    %476 = vmatprep.mubr.f32.mxu0 0.0
    %477 = vmatmul.mubr.f32.gmra.mxu0 %v409
    %v478 = vpop.f32.mrf.mxu0
    %v479 = vadd.f32 0.0, %v478
    %v480 = vpop.f32.mrf.mxu0
    %481 = vdwg.mxu0
    %v482 = vmax.f32 %v479, 1e-24
    %v483 = vrsqrt.pop %v482
    %v484 = vmul.f32 %v406, %v483
    %v485 = vld [vmem:[#allocation2] sm:$0x1]
    %487 = vset.pattern.permute.xlu0 0
    %488 = vperm.xlu0 %487, %v485
    %v489 = vpop.permute.xlu0 %488
    %v491 = vlaneseq
    %v492 = vshrl.u32 %v491, 7
    %v493 = vsub.s32 0, %v492
    %v494 = vrot.slane %v489, %v493
    %v495 = vadd.f32 %v484, %v494
    %496 = vst.msk [vmem:[#allocation9] sm:$0x1] %vm74, %v495
    // Predicated region
    $region46: #{tpu_custom_call.1} parent=1 // pred_check
      _
    $region47: #{tpu_custom_call.1} parent=1 // pred_check_branch
      %498 = sbr.rel (0) target = $region49
    $region48: #{tpu_custom_call.1} parent=1 // pred_region
      %s500 = ssub.s32 16, 16
      %501 = vsyncadd [#allocation5], %s500
      %s503 = sshll.u32 [#allocation9], 4
      %s504 = int_to_ptr.vmem [resolvable:$true] %s503
      %506 = dma.vmem_to_hbm [thread:$0]  %s504, 16, %s8, [#allocation5]
    $region49: #{tpu_custom_call.1} parent=1 // pred_fallthru
      _
    // Predicated region
    $region50: #{tpu_custom_call.1} parent=1 // pred_check
      _
    $region51: #{tpu_custom_call.1} parent=1 // pred_check_branch
      %508 = sbr.rel (0) target = $region53
    $region52: #{tpu_custom_call.1} parent=1 // pred_region
      %509 = dma.done [#allocation5], 16
    $region53: #{tpu_custom_call.1} parent=1 // pred_fallthru
      _
    %510 = vsyncpa [#allocation4], 1
    %511 = vsyncpa [#allocation7], 1
    %512 = vsyncpa [#allocation5], 1

</llo_original>
